<compile_context>
chip_gen: v7x
topology: tpu7x:2x2x1
jax: 0.10.0
libtpu: 0.0.40
codegen_flags: <defaults>
</compile_context>

<pallas_src>
import functools

import jax
import jax.numpy as jnp
from jax.experimental import pallas as pl
from jax.experimental.pallas import tpu as pltpu


# Permutation applied to the torch gate order [in, forget, cell, out] so the
# sigmoid gates become contiguous: kernel order is [in, forget, out, cell].
_GATE_PERM = (0, 1, 3, 2)


# ----------------------------------------------------------------------------
# One-time weight preparation (NOT per-call / per-timestep work).
# ----------------------------------------------------------------------------
def prepare_lstm_weights(weights_ih, weights_hh, bias, *, lane=128,
                         compute_dtype=None):
    """Fuse + transpose + gate-reorder + gate-pad the torch-layout weights once.

    weights_ih: (4H, I), weights_hh: (4H, H), bias: (4H,)   (torch layout)
    Returns:
      w_fused: (I + H, 4*Hp)   so that  gates = [x, hx] @ w_fused + b_fused
      b_fused: (1, 4*Hp)  float32
      H, Hp   (Hp = H rounded up to a multiple of `lane`)
    Kernel-side gate order is [in, forget, out, cell] (sigmoids contiguous).
    """
    four_h, I = weights_ih.shape
    H = four_h // 4
    Hp = ((H + lane - 1) // lane) * lane
    perm = jnp.asarray(_GATE_PERM)

    w = jnp.concatenate([weights_ih.T, weights_hh.T], axis=0)      # (I+H, 4H)
    w = w.reshape(I + H, 4, H)[:, perm, :]                         # reorder gates
    w = jnp.pad(w, ((0, 0), (0, 0), (0, Hp - H))).reshape(I + H, 4 * Hp)

    b = bias.reshape(4, H)[perm, :]
    b = jnp.pad(b, ((0, 0), (0, Hp - H))).reshape(1, 4 * Hp)

    if compute_dtype is not None:
        w = w.astype(compute_dtype)       # e.g. bf16 for full-rate MXU
    return w, b.astype(jnp.float32), H, Hp


def _gate_math(gates, cx_f32, hp):
    """gates: (B, 4*Hp) f32 in order [in, forget, out, cell]. Returns hy, cy f32."""
    sig = jax.nn.sigmoid(gates[:, 0:3 * hp])     # one wide EUP op
    ingate     = sig[:, 0 * hp:1 * hp]
    forgetgate = sig[:, 1 * hp:2 * hp]
    outgate    = sig[:, 2 * hp:3 * hp]
    cellgate   = jnp.tanh(gates[:, 3 * hp:4 * hp])

    cy = forgetgate * cx_f32 + ingate * cellgate
    hy = outgate * jnp.tanh(cy)
    return hy, cy


# ----------------------------------------------------------------------------
# Single-step cell kernel: one (B, I+H) @ (I+H, 4*Hp) matmul + gate math.
# ----------------------------------------------------------------------------
def _lstm_cell_kernel(xh_ref, cx_ref, w_ref, b_ref, hy_ref, cy_ref, *, hp):
    # Fused matmul, f32 accumulation; bias added once after the matmul.
    gates = (jnp.dot(xh_ref[...], w_ref[...],
                     preferred_element_type=jnp.float32)
             + b_ref[...])                                     # (B, 4*Hp) f32

    hy, cy = _gate_math(gates, cx_ref[...].astype(jnp.float32), hp)

    cy_ref[...] = cy.astype(cy_ref.dtype)
    hy_ref[...] = hy.astype(hy_ref.dtype)


def lstm_cell(x, hx, cx, w_fused, b_fused, H, Hp):
    """Single LSTMCell step.  x:(B,I), hx/cx:(B,H) -> (hy, cy) each (B,H)."""
    B, I = x.shape
    dt = w_fused.dtype                                  # matmul dtype (f32/bf16)
    xh = jnp.concatenate([x, hx], axis=1).astype(dt)    # (B, I+H)
    cx_p = jnp.pad(cx, ((0, 0), (0, Hp - H)))           # (B, Hp), lane-dense

    vmem = pl.BlockSpec(memory_space=pltpu.MemorySpace.VMEM)
    kernel = functools.partial(_lstm_cell_kernel, hp=Hp)
    # NOTE: at large B / H, add a ("parallel", ..., "arbitrary") grid over
    # batch / 4H tiles and size tiles for VMEM (64 MiB on v7x); at this toy
    # size a single ungridded launch is optimal.
    hy_p, cy_p = pl.pallas_call(
        kernel,
        out_shape=(jax.ShapeDtypeStruct((B, Hp), x.dtype),
                   jax.ShapeDtypeStruct((B, Hp), x.dtype)),
        in_specs=[vmem, vmem, vmem, vmem],
        out_specs=(vmem, vmem),
        compiler_params=pltpu.CompilerParams(
            vmem_limit_bytes=32 * 1024 * 1024),
    )(xh, cx_p, w_fused, b_fused)
    return hy_p[:, :H], cy_p[:, :H]


# ----------------------------------------------------------------------------
# Sequence kernel: T recurrent steps inside ONE pallas_call (grid=(T,)).
# W_hh stays resident in VMEM, h/c state lives in VMEM scratch across steps.
# ----------------------------------------------------------------------------
def _lstm_seq_kernel(xproj_ref, whh_ref, h0_ref, c0_ref,
                     hy_ref, cy_ref, h_state, c_state, *, hp):
    t = pl.program_id(0)

    @pl.when(t == 0)
    def _():
        h_state[...] = h0_ref[...]
        c_state[...] = c0_ref[...]

    # Recurrent matmul only: the input projection (incl. bias) was precomputed
    # for all timesteps in one big matmul outside the loop.
    gates = (xproj_ref[0]
             + jnp.dot(h_state[...].astype(whh_ref.dtype), whh_ref[...],
                       preferred_element_type=jnp.float32))    # (B, 4*Hp) f32

    hy, cy = _gate_math(gates, c_state[...], hp)

    c_state[...] = cy
    h_state[...] = hy
    hy_ref[0] = hy.astype(hy_ref.dtype)
    cy_ref[0] = cy.astype(cy_ref.dtype)


def lstm_sequence(x_seq, h0, c0, w_fused, b_fused, H, Hp):
    """Run T LSTM steps in one kernel.  x_seq:(T,B,I) -> hy_seq, cy_seq (T,B,H)."""
    T, B, I = x_seq.shape
    dt = w_fused.dtype
    w_ih = w_fused[:I]                                   # (I, 4*Hp)
    w_hh = jnp.pad(w_fused[I:], ((0, Hp - H), (0, 0)))   # (Hp, 4*Hp), K padded

    # Precompute input projections for all timesteps in ONE lane-dense matmul
    # (avoids a degenerate K=I matmul inside the recurrent loop); bias folded in.
    xproj = (jnp.einsum('tbi,ij->tbj', x_seq.astype(dt), w_ih,
                        preferred_element_type=jnp.float32)
             + b_fused)                                  # (T, B, 4*Hp) f32

    h0_p = jnp.pad(h0, ((0, 0), (0, Hp - H))).astype(jnp.float32)
    c0_p = jnp.pad(c0, ((0, 0), (0, Hp - H))).astype(jnp.float32)

    kernel = functools.partial(_lstm_seq_kernel, hp=Hp)
    hy_seq, cy_seq = pl.pallas_call(
        kernel,
        out_shape=(jax.ShapeDtypeStruct((T, B, Hp), x_seq.dtype),
                   jax.ShapeDtypeStruct((T, B, Hp), x_seq.dtype)),
        grid=(T,),
        in_specs=[
            pl.BlockSpec((1, B, 4 * Hp), lambda t: (t, 0, 0)),  # per-step x-proj
            pl.BlockSpec((Hp, 4 * Hp), lambda t: (0, 0)),       # W_hh (resident)
            pl.BlockSpec((B, Hp), lambda t: (0, 0)),            # h0   (resident)
            pl.BlockSpec((B, Hp), lambda t: (0, 0)),            # c0   (resident)
        ],
        out_specs=(
            pl.BlockSpec((1, B, Hp), lambda t: (t, 0, 0)),
            pl.BlockSpec((1, B, Hp), lambda t: (t, 0, 0)),
        ),
        scratch_shapes=[pltpu.VMEM((B, Hp), jnp.float32),   # h state
                        pltpu.VMEM((B, Hp), jnp.float32)],  # c state
        compiler_params=pltpu.CompilerParams(
            dimension_semantics=("arbitrary",),   # time axis is sequential
            vmem_limit_bytes=32 * 1024 * 1024),
    )(xproj, w_hh, h0_p, c0_p)
    return hy_seq[:, :, :H], cy_seq[:, :, :H]


# ----------------------------------------------------------------------------
# Pure-JAX reference mirroring the PyTorch forward exactly.
# ----------------------------------------------------------------------------
def lstm_cell_ref(x, hx, cx, weights_ih, weights_hh, bias):
    gates = x @ weights_ih.T + hx @ weights_hh.T + bias
    H = hx.shape[1]
    ingate = jax.nn.sigmoid(gates[:, 0:H])
    forgetgate = jax.nn.sigmoid(gates[:, H:2 * H])
    cellgate = jnp.tanh(gates[:, 2 * H:3 * H])
    outgate = jax.nn.sigmoid(gates[:, 3 * H:4 * H])
    cy = forgetgate * cx + ingate * cellgate
    hy = outgate * jnp.tanh(cy)
    return hy, cy


if __name__ == "__main__":
    input_size = 1
    hidden_size = 20
    batch = 2
    seq_len = 8

    key = jax.random.PRNGKey(0)
    k_x, k_xs, k_wih, k_whh, k_b = jax.random.split(key, 5)

    # Deterministic synthetic parameters (same shapes as the nn.Parameter randn's).
    weights_ih = jax.random.normal(k_wih, (4 * hidden_size, input_size), jnp.float32)
    weights_hh = jax.random.normal(k_whh, (4 * hidden_size, hidden_size), jnp.float32)
    bias = jax.random.normal(k_b, (4 * hidden_size,), jnp.float32)

    x = jax.random.normal(k_x, (batch, input_size), jnp.float32)
    hx = jnp.zeros((batch, hidden_size), jnp.float32)
    cx = jnp.zeros((batch, hidden_size), jnp.float32)

    # One-time weight prep (kept out of the per-step hot path).
    w_f32, b_f32, H, Hp = prepare_lstm_weights(weights_ih, weights_hh, bias)
    w_bf16, b_bf16, _, _ = prepare_lstm_weights(weights_ih, weights_hh, bias,
                                                compute_dtype=jnp.bfloat16)

    # --- single step, f32 matmul ---
    hy, cy = lstm_cell(x, hx, cx, w_f32, b_f32, H, Hp)
    jax.block_until_ready((hy, cy))
    hy_ref, cy_ref = lstm_cell_ref(x, hx, cx, weights_ih, weights_hh, bias)
    assert jnp.allclose(hy, hy_ref, atol=1e-5, rtol=1e-5)
    assert jnp.allclose(cy, cy_ref, atol=1e-5, rtol=1e-5)

    # --- single step, bf16 matmul (f32 accumulation + f32 gate math) ---
    hy_b, cy_b = lstm_cell(x, hx, cx, w_bf16, b_bf16, H, Hp)
    jax.block_until_ready((hy_b, cy_b))
    assert jnp.allclose(hy_b, hy_ref, atol=1e-1, rtol=1e-1)
    assert jnp.allclose(cy_b, cy_ref, atol=1e-1, rtol=1e-1)

    # --- full sequence inside one kernel (weights + state resident) ---
    x_seq = jax.random.normal(k_xs, (seq_len, batch, input_size), jnp.float32)
    hy_seq, cy_seq = lstm_sequence(x_seq, hx, cx, w_f32, b_f32, H, Hp)
    jax.block_until_ready((hy_seq, cy_seq))

    def _scan_step(carry, x_t):
        h, c = carry
        h2, c2 = lstm_cell_ref(x_t, h, c, weights_ih, weights_hh, bias)
        return (h2, c2), (h2, c2)

    _, (hy_seq_ref, cy_seq_ref) = jax.lax.scan(_scan_step, (hx, cx), x_seq)
    assert jnp.allclose(hy_seq, hy_seq_ref, atol=1e-4, rtol=1e-4)
    assert jnp.allclose(cy_seq, cy_seq_ref, atol=1e-4, rtol=1e-4)

    print("KERNEL_OK")
</pallas_src>

<mosaic_0001>
module attributes {stable_mosaic.version = 11 : i64} {
  func.func @_lstm_cell_kernel(%arg0: memref<2x21xf32, #tpu.memory_space<vmem>>, %arg1: memref<2x128xf32, #tpu.memory_space<vmem>>, %arg2: memref<21x512xf32, #tpu.memory_space<vmem>>, %arg3: memref<1x512xf32, #tpu.memory_space<vmem>>, %arg4: memref<2x128xf32, #tpu.memory_space<vmem>>, %arg5: memref<2x128xf32, #tpu.memory_space<vmem>>) attributes {dimension_semantics = [], scalar_prefetch = 0 : i64, scratch_operands = 0 : i64, tpu.core_type = #tpu.core_type<tc>} {
    %c0 = arith.constant 0 : index
    %c0_0 = arith.constant 0 : index
    %0 = vector.load %arg0[%c0, %c0_0] : memref<2x21xf32, #tpu.memory_space<vmem>>, vector<2x21xf32>
    %c0_1 = arith.constant 0 : index
    %c0_2 = arith.constant 0 : index
    %1 = vector.load %arg2[%c0_1, %c0_2] : memref<21x512xf32, #tpu.memory_space<vmem>>, vector<21x512xf32>
    %cst = arith.constant dense<0.000000e+00> : vector<2x512xf32>
    %2 = tpu.matmul %0, %1, %cst {dimension_numbers = #tpu.dot_dimension_numbers<[1], [0], [0], [1], [0, 0, 1, 1], [], []>} : vector<2x21xf32>, vector<21x512xf32>, vector<2x512xf32> -> vector<2x512xf32>
    %c0_3 = arith.constant 0 : index
    %c0_4 = arith.constant 0 : index
    %3 = vector.load %arg3[%c0_3, %c0_4] : memref<1x512xf32, #tpu.memory_space<vmem>>, vector<1x512xf32>
    %4 = vector.broadcast %3 : vector<1x512xf32> to vector<2x512xf32>
    %5 = arith.addf %2, %4 : vector<2x512xf32>
    %c0_5 = arith.constant 0 : index
    %c0_6 = arith.constant 0 : index
    %6 = vector.load %arg1[%c0_5, %c0_6] : memref<2x128xf32, #tpu.memory_space<vmem>>, vector<2x128xf32>
    %7 = vector.extract_strided_slice %5 {offsets = [0, 0], sizes = [2, 384], strides = [1, 1]} : vector<2x512xf32> to vector<2x384xf32>
    %8 = arith.negf %7 : vector<2x384xf32>
    %9 = math.exp %8 : vector<2x384xf32>
    %cst_7 = arith.constant 1.000000e+00 : f32
    %10 = vector.broadcast %cst_7 : f32 to vector<2x384xf32>
    %11 = arith.addf %10, %9 : vector<2x384xf32>
    %12 = arith.divf %10, %11 : vector<2x384xf32>
    %13 = vector.extract_strided_slice %12 {offsets = [0, 0], sizes = [2, 128], strides = [1, 1]} : vector<2x384xf32> to vector<2x128xf32>
    %14 = vector.extract_strided_slice %12 {offsets = [0, 128], sizes = [2, 128], strides = [1, 1]} : vector<2x384xf32> to vector<2x128xf32>
    %15 = vector.extract_strided_slice %12 {offsets = [0, 256], sizes = [2, 128], strides = [1, 1]} : vector<2x384xf32> to vector<2x128xf32>
    %16 = vector.extract_strided_slice %5 {offsets = [0, 384], sizes = [2, 128], strides = [1, 1]} : vector<2x512xf32> to vector<2x128xf32>
    %17 = math.tanh %16 : vector<2x128xf32>
    %18 = arith.mulf %14, %6 : vector<2x128xf32>
    %19 = arith.mulf %13, %17 : vector<2x128xf32>
    %20 = arith.addf %18, %19 : vector<2x128xf32>
    %21 = math.tanh %20 : vector<2x128xf32>
    %22 = arith.mulf %15, %21 : vector<2x128xf32>
    %c0_8 = arith.constant 0 : index
    %c0_9 = arith.constant 0 : index
    %23 = vector.load %arg5[%c0_8, %c0_9] : memref<2x128xf32, #tpu.memory_space<vmem>>, vector<2x128xf32>
    tpu.vector_store %arg5[%c0_8, %c0_9], %20 {strides = array<i32>} : memref<2x128xf32, #tpu.memory_space<vmem>>, vector<2x128xf32>,
    %c0_10 = arith.constant 0 : index
    %c0_11 = arith.constant 0 : index
    %24 = vector.load %arg4[%c0_10, %c0_11] : memref<2x128xf32, #tpu.memory_space<vmem>>, vector<2x128xf32>
    tpu.vector_store %arg4[%c0_10, %c0_11], %22 {strides = array<i32>} : memref<2x128xf32, #tpu.memory_space<vmem>>, vector<2x128xf32>,
    return
  }
}

</mosaic_0001>

<llo_original>
// kernel: tpu_custom_call.1
$region0: #{tpu_custom_call.1}
  #allocation0 [shape = 'u32[]', space=smem, size = 0x4, offset = 0x4, fixed_abs, tag = 'smem constant byte address 0x4 - core index']
  #allocation1 [shape = 'u32[144,128]{1,0:T(1,128)}', space=vmem, size = 0x12000, scoped, tag = 'internal scratch']
  %s0 = inlined_call_operand.hbm [shape: f32[2,21], index: 0, kind: input, shape index: {}]
  %s1 = inlined_call_operand.vmem [shape: f32[2,128], index: 1, kind: input, shape index: {}]
  %s2 = inlined_call_operand.hbm [shape: f32[21,512], index: 2, kind: input, shape index: {}]
  %s3 = inlined_call_operand.vmem [shape: f32[1,512], index: 3, kind: input, shape index: {}]
  %s4 = inlined_call_operand.hbm [shape: f32[2,128], index: 4, kind: output, shape index: {0}]
  %s5 = inlined_call_operand.hbm [shape: f32[2,128], index: 5, kind: output, shape index: {1}]
  %6 = xla_tuple %s4, %s5
  %s7 = sld [smem:[#allocation0]]
  $region42: #{tpu_custom_call.1} parent=0
    _
  %s9 = ssub.s32 1, %s7
  %s10 = scalar_select 0, %s9, %s7
  $region1: #{tpu_custom_call.1} parent=0
    #allocation2 [shape = 'u8[1024]{0}', space=vmem, size = 0x400, scoped, tag = 'input window, operand 0, single buffered']
    #allocation3 [shape = 's32[1]{0}', space=sflag, size = 0x4, scoped, tag = 'scoped memory for tpu_custom_call.1']
    #allocation4 [shape = 's32[1]{0}', space=sflag, size = 0x4, scoped, tag = 'scoped memory for tpu_custom_call.1']
    #allocation5 [shape = 'u8[49152]{0}', space=vmem, size = 0xc000, scoped, tag = 'input window, operand 2, single buffered']
    #allocation6 [shape = 's32[1]{0}', space=sflag, size = 0x4, scoped, tag = 'scoped memory for tpu_custom_call.1']
    #allocation7 [shape = 'u8[1024]{0}', space=vmem, size = 0x400, scoped, tag = 'output window, operand 0, single buffered']
    #allocation8 [shape = 'u8[1024]{0}', space=vmem, size = 0x400, scoped, tag = 'output window, operand 1, single buffered']
    #allocation9 [shape = 's32[1]{0}', space=sflag, size = 0x4, scoped, tag = 'scoped memory for tpu_custom_call.1']
    %11 = vsyncpa [#allocation3], 0
    %12 = vsyncpa [#allocation6], 0
    %13 = vsyncpa [#allocation4], 0
    %14 = vsyncpa [#allocation9], 0
    // Predicated region
    $region2: #{tpu_custom_call.1} parent=1 // pred_check
      _
    $region3: #{tpu_custom_call.1} parent=1 // pred_check_branch
      %16 = sbr.rel (0) target = $region5
    $region4: #{tpu_custom_call.1} parent=1 // pred_region
      %s18 = ssub.s32 32, 32
      %19 = vsyncadd [#allocation3], %s18
      %s21 = sshll.u32 [#allocation2], 4
      %s22 = int_to_ptr.vmem [resolvable:$true] %s21
      %24 = dma.hbm_to_vmem [thread:$0]  %s0, 32, %s22, [#allocation3]
    $region5: #{tpu_custom_call.1} parent=1 // pred_fallthru
      _
    // Predicated region
    $region6: #{tpu_custom_call.1} parent=1 // pred_check
      _
    $region7: #{tpu_custom_call.1} parent=1 // pred_check_branch
      %26 = sbr.rel (0) target = $region9
    $region8: #{tpu_custom_call.1} parent=1 // pred_region
      _
    $region9: #{tpu_custom_call.1} parent=1 // pred_fallthru
      _
    // Predicated region
    $region10: #{tpu_custom_call.1} parent=1 // pred_check
      _
    $region11: #{tpu_custom_call.1} parent=1 // pred_check_branch
      %28 = sbr.rel (0) target = $region13
    $region12: #{tpu_custom_call.1} parent=1 // pred_region
      %s30 = ssub.s32 1536, 1536
      %31 = vsyncadd [#allocation6], %s30
      %s32 = sshll.u32 [#allocation5], 4
      %s33 = int_to_ptr.vmem [resolvable:$true] %s32
      %38 = dma.hbm_to_vmem [thread:$0]  %s2, 1536, %s33, [#allocation6], 512, 512, 32
    $region13: #{tpu_custom_call.1} parent=1 // pred_fallthru
      _
    // Predicated region
    $region14: #{tpu_custom_call.1} parent=1 // pred_check
      _
    $region15: #{tpu_custom_call.1} parent=1 // pred_check_branch
      %40 = sbr.rel (0) target = $region17
    $region16: #{tpu_custom_call.1} parent=1 // pred_region
      _
    $region17: #{tpu_custom_call.1} parent=1 // pred_fallthru
      _
    // Predicated region
    $region18: #{tpu_custom_call.1} parent=1 // pred_check
      _
    $region19: #{tpu_custom_call.1} parent=1 // pred_check_branch
      %42 = sbr.rel (0) target = $region21
    $region20: #{tpu_custom_call.1} parent=1 // pred_region
      %43 = dma.done [#allocation3], 32
    $region21: #{tpu_custom_call.1} parent=1 // pred_fallthru
      _
    // Predicated region
    $region22: #{tpu_custom_call.1} parent=1 // pred_check
      _
    $region23: #{tpu_custom_call.1} parent=1 // pred_check_branch
      %45 = sbr.rel (0) target = $region25
    $region24: #{tpu_custom_call.1} parent=1 // pred_region
      %46 = dma.done [#allocation6], 1536
    $region25: #{tpu_custom_call.1} parent=1 // pred_fallthru
      _
    %v47 = vld [vmem:[#allocation2] sm:$0x3]
    %v48 = vld [vmem:[#allocation5] sm:$0xff]
    %v49 = vld [vmem:[#allocation5 + $0x8] sm:$0xff]
    %v50 = vld [vmem:[#allocation5 + $0x10] sm:$0xff]
    %v51 = vld [vmem:[#allocation5 + $0x18] sm:$0xff]
    %v52 = vld [vmem:[#allocation5 + $0x20] sm:$0xff]
    %v53 = vld [vmem:[#allocation5 + $0x28] sm:$0xff]
    %v54 = vld [vmem:[#allocation5 + $0x30] sm:$0xff]
    %v55 = vld [vmem:[#allocation5 + $0x38] sm:$0xff]
    %v56 = vld [vmem:[#allocation5 + $0x40] sm:$0x1f]
    %v57 = vld [vmem:[#allocation5 + $0x48] sm:$0x1f]
    %v58 = vld [vmem:[#allocation5 + $0x50] sm:$0x1f]
    %v59 = vld [vmem:[#allocation5 + $0x58] sm:$0x1f]
    %v60 = vld [vmem:[%s3] sm:$0xf]
    %v62 = vlaneseq
    %v63 = vshrl.u32 %v62, 7
    %v64 = vsub.s32 0, %v63
    %v65 = vrot.slane %v60, %v64
    %v66 = vlaneseq
    %v67 = vshrl.u32 %v66, 7
    %v68 = vsub.s32 1, %v67
    %v69 = vrot.slane %v60, %v68
    %v70 = vlaneseq
    %v71 = vshrl.u32 %v70, 7
    %v72 = vsub.s32 2, %v71
    %v73 = vrot.slane %v60, %v72
    %v74 = vlaneseq
    %v75 = vshrl.u32 %v74, 7
    %v76 = vsub.s32 3, %v75
    %v77 = vrot.slane %v60, %v76
    %vm82 = vcmask 171008
    %v84 = vsel %vm82, %v47, 0
    %vm86 = vcmask 1044480
    %v88 = vsel %vm86, %v56, 0
    %v91 = vsel %vm86, %v57, 0
    %v94 = vsel %vm86, %v58, 0
    %v97 = vsel %vm86, %v59, 0
    %99 = vmatprep.subr.mxu0 %v49
    %100 = vmatpush1.msra.mxu0 %v48
    %101 = vmatprep.subr.mxu0 %v53
    %102 = vmatpush1.msra.mxu0 %v52
    %103 = vmatprep.subr.mxu0 %v91
    %104 = vmatpush1.msra.mxu0 %v88
    %105 = vmatprep.subr.mxu0 0.0
    %106 = vmatpush1.msra.mxu0 0.0
    %107 = vmatprep.subr.mxu0 0.0
    %108 = vmatpush1.msra.mxu0 0.0
    %109 = vmatprep.subr.mxu0 0.0
    %110 = vmatpush1.msra.mxu0 0.0
    %111 = vmatprep.subr.mxu0 0.0
    %112 = vmatpush1.msra.mxu0 0.0
    %113 = vmatprep.subr.mxu0 0.0
    %114 = vmatpush1.msra.mxu0 0.0
    %115 = vmatprep.subr.mxu0 0.0
    %116 = vmatpush1.msra.mxu0 0.0
    %117 = vmatprep.subr.mxu0 0.0
    %118 = vmatpush1.msra.mxu0 0.0
    %119 = vmatprep.subr.mxu0 0.0
    %120 = vmatpush1.msra.mxu0 0.0
    %121 = vmatprep.subr.mxu0 0.0
    %122 = vmatpush1.msra.mxu0 0.0
    %123 = vmatprep.subr.mxu0 0.0
    %124 = vmatpush1.msra.mxu0 0.0
    %125 = vmatprep.subr.mxu0 0.0
    %126 = vmatpush1.msra.mxu0 0.0
    %127 = vmatprep.subr.mxu0 0.0
    %128 = vmatpush1.msra.mxu0 0.0
    %129 = vmatprep.subr.mxu0 0.0
    %130 = vmatpush1.msra.mxu0 0.0
    %131 = vmatprep.subr.mxu0 0.0
    %132 = vmatpush1.msra.mxu0 0.0
    %133 = vmatprep.subr.mxu0 0.0
    %134 = vmatpush1.msra.mxu0 0.0
    %135 = vmatprep.subr.mxu0 0.0
    %136 = vmatpush1.msra.mxu0 0.0
    %137 = vmatprep.subr.mxu0 0.0
    %138 = vmatpush1.msra.mxu0 0.0
    %139 = vmatprep.subr.mxu0 0.0
    %140 = vmatpush1.msra.mxu0 0.0
    %141 = vmatprep.subr.mxu0 0.0
    %142 = vmatpush1.msra.mxu0 0.0
    %143 = vmatprep.subr.mxu0 0.0
    %144 = vmatpush1.msra.mxu0 0.0
    %145 = vmatprep.subr.mxu0 0.0
    %146 = vmatpush1.msra.mxu0 0.0
    %147 = vmatprep.subr.mxu0 0.0
    %148 = vmatpush1.msra.mxu0 0.0
    %149 = vmatprep.subr.mxu0 0.0
    %150 = vmatpush1.msra.mxu0 0.0
    %151 = vmatprep.subr.mxu0 0.0
    %152 = vmatpush1.msra.mxu0 0.0
    %153 = vmatprep.subr.mxu0 0.0
    %154 = vmatpush1.msra.mxu0 0.0
    %155 = vmatprep.subr.mxu0 0.0
    %156 = vmatpush1.msra.mxu0 0.0
    %157 = vmatprep.subr.mxu0 0.0
    %158 = vmatpush1.msra.mxu0 0.0
    %159 = vmatprep.subr.mxu0 0.0
    %160 = vmatpush1.msra.mxu0 0.0
    %161 = vmatprep.subr.mxu0 0.0
    %162 = vmatpush1.msra.mxu0 0.0
    %163 = vmatprep.mubr.f32.mxu0 0.0
    %164 = vmatmul.mubr.f32.gmra.mrb[0].mxu0 %v84
    %v165 = vpop.f32.mrb[0].mxu0
    %v166 = vadd.f32 %v65, %v165
    %v167 = vpop.f32.mrb[0].mxu0
    %v168 = vadd.f32 %v69, %v167
    %169 = vdwg.mxu0
    %170 = vmatprep.subr.mxu0 %v51
    %171 = vmatpush1.msra.mxu0 %v50
    %172 = vmatprep.subr.mxu0 %v55
    %173 = vmatpush1.msra.mxu0 %v54
    %174 = vmatprep.subr.mxu0 %v97
    %175 = vmatpush1.msra.mxu0 %v94
    %176 = vmatprep.subr.mxu0 0.0
    %177 = vmatpush1.msra.mxu0 0.0
    %178 = vmatprep.subr.mxu0 0.0
    %179 = vmatpush1.msra.mxu0 0.0
    %180 = vmatprep.subr.mxu0 0.0
    %181 = vmatpush1.msra.mxu0 0.0
    %182 = vmatprep.subr.mxu0 0.0
    %183 = vmatpush1.msra.mxu0 0.0
    %184 = vmatprep.subr.mxu0 0.0
    %185 = vmatpush1.msra.mxu0 0.0
    %186 = vmatprep.subr.mxu0 0.0
    %187 = vmatpush1.msra.mxu0 0.0
    %188 = vmatprep.subr.mxu0 0.0
    %189 = vmatpush1.msra.mxu0 0.0
    %190 = vmatprep.subr.mxu0 0.0
    %191 = vmatpush1.msra.mxu0 0.0
    %192 = vmatprep.subr.mxu0 0.0
    %193 = vmatpush1.msra.mxu0 0.0
    %194 = vmatprep.subr.mxu0 0.0
    %195 = vmatpush1.msra.mxu0 0.0
    %196 = vmatprep.subr.mxu0 0.0
    %197 = vmatpush1.msra.mxu0 0.0
    %198 = vmatprep.subr.mxu0 0.0
    %199 = vmatpush1.msra.mxu0 0.0
    %200 = vmatprep.subr.mxu0 0.0
    %201 = vmatpush1.msra.mxu0 0.0
    %202 = vmatprep.subr.mxu0 0.0
    %203 = vmatpush1.msra.mxu0 0.0
    %204 = vmatprep.subr.mxu0 0.0
    %205 = vmatpush1.msra.mxu0 0.0
    %206 = vmatprep.subr.mxu0 0.0
    %207 = vmatpush1.msra.mxu0 0.0
    %208 = vmatprep.subr.mxu0 0.0
    %209 = vmatpush1.msra.mxu0 0.0
    %210 = vmatprep.subr.mxu0 0.0
    %211 = vmatpush1.msra.mxu0 0.0
    %212 = vmatprep.subr.mxu0 0.0
    %213 = vmatpush1.msra.mxu0 0.0
    %214 = vmatprep.subr.mxu0 0.0
    %215 = vmatpush1.msra.mxu0 0.0
    %216 = vmatprep.subr.mxu0 0.0
    %217 = vmatpush1.msra.mxu0 0.0
    %218 = vmatprep.subr.mxu0 0.0
    %219 = vmatpush1.msra.mxu0 0.0
    %220 = vmatprep.subr.mxu0 0.0
    %221 = vmatpush1.msra.mxu0 0.0
    %222 = vmatprep.subr.mxu0 0.0
    %223 = vmatpush1.msra.mxu0 0.0
    %224 = vmatprep.subr.mxu0 0.0
    %225 = vmatpush1.msra.mxu0 0.0
    %226 = vmatprep.subr.mxu0 0.0
    %227 = vmatpush1.msra.mxu0 0.0
    %228 = vmatprep.subr.mxu0 0.0
    %229 = vmatpush1.msra.mxu0 0.0
    %230 = vmatprep.subr.mxu0 0.0
    %231 = vmatpush1.msra.mxu0 0.0
    %232 = vmatprep.subr.mxu0 0.0
    %233 = vmatpush1.msra.mxu0 0.0
    %234 = vmatprep.mubr.f32.mxu0 0.0
    %235 = vmatmul.mubr.f32.gmra.mrb[0].mxu0 %v84
    %v236 = vpop.f32.mrb[0].mxu0
    %v237 = vadd.f32 %v73, %v236
    %v238 = vpop.f32.mrb[0].mxu0
    %v239 = vadd.f32 %v77, %v238
    %240 = vdwg.mxu0
    %v241 = vld [vmem:[%s1] sm:$0x3]
    %v242 = vxor.u32 %v166, 2147483648
    %v243 = vxor.u32 %v168, 2147483648
    %v244 = vxor.u32 %v237, 2147483648
    %v245 = vmul.f32 %v242, 1.442695
    %v246 = vpow.pop %v245
    %v247 = vmul.f32 %v243, 1.442695
    %v248 = vpow.pop %v247
    %v249 = vmul.f32 %v244, 1.442695
    %v250 = vpow.pop %v249
    %v251 = vadd.f32 %v246, 1.0
    %v252 = vadd.f32 %v248, 1.0
    %v253 = vadd.f32 %v250, 1.0
    %v254 = vrcp.pop %v251
    %v255 = vmul.f32 1.0, %v254
    %v256 = vrcp.pop %v252
    %v257 = vmul.f32 1.0, %v256
    %v258 = vrcp.pop %v253
    %v259 = vmul.f32 1.0, %v258
    %v260 = vtanh.pop %v239
    %v261 = vmul.f32 %v257, %v241
    %v262 = vmul.f32 %v255, %v260
    %v263 = vadd.f32 %v261, %v262
    %v264 = vtanh.pop %v263
    %v265 = vmul.f32 %v259, %v264
    %266 = vst [vmem:[#allocation8] sm:$0x3] %v263
    %267 = vst [vmem:[#allocation7] sm:$0x3] %v265
    // Predicated region
    $region26: #{tpu_custom_call.1} parent=1 // pred_check
      _
    $region27: #{tpu_custom_call.1} parent=1 // pred_check_branch
      %269 = sbr.rel (0) target = $region29
    $region28: #{tpu_custom_call.1} parent=1 // pred_region
      %s271 = ssub.s32 32, 32
      %272 = vsyncadd [#allocation4], %s271
      %s274 = sshll.u32 [#allocation7], 4
      %s275 = int_to_ptr.vmem [resolvable:$true] %s274
      %277 = dma.vmem_to_hbm [thread:$0]  %s275, 32, %s4, [#allocation4]
    $region29: #{tpu_custom_call.1} parent=1 // pred_fallthru
      _
    // Predicated region
    $region30: #{tpu_custom_call.1} parent=1 // pred_check
      _
    $region31: #{tpu_custom_call.1} parent=1 // pred_check_branch
      %279 = sbr.rel (0) target = $region33
    $region32: #{tpu_custom_call.1} parent=1 // pred_region
      %s281 = ssub.s32 32, 32
      %282 = vsyncadd [#allocation9], %s281
      %s284 = sshll.u32 [#allocation8], 4
      %s285 = int_to_ptr.vmem [resolvable:$true] %s284
      %287 = dma.vmem_to_hbm [thread:$0]  %s285, 32, %s5, [#allocation9]
    $region33: #{tpu_custom_call.1} parent=1 // pred_fallthru
      _
    // Predicated region
    $region34: #{tpu_custom_call.1} parent=1 // pred_check
      _
    $region35: #{tpu_custom_call.1} parent=1 // pred_check_branch
      %289 = sbr.rel (0) target = $region37
    $region36: #{tpu_custom_call.1} parent=1 // pred_region
      %290 = dma.done [#allocation4], 32
    $region37: #{tpu_custom_call.1} parent=1 // pred_fallthru
      _
    // Predicated region
    $region38: #{tpu_custom_call.1} parent=1 // pred_check
      _
    $region39: #{tpu_custom_call.1} parent=1 // pred_check_branch
      %292 = sbr.rel (0) target = $region41
    $region40: #{tpu_custom_call.1} parent=1 // pred_region
      %293 = dma.done [#allocation9], 32
    $region41: #{tpu_custom_call.1} parent=1 // pred_fallthru
      _
    %294 = vsyncpa [#allocation3], 1
    %295 = vsyncpa [#allocation6], 1
    %296 = vsyncpa [#allocation4], 1
    %297 = vsyncpa [#allocation9], 1

</llo_original>
